<compile_context>
chip_gen: v6e
topology: v6e:2x2x1
jax: 0.10.0
libtpu: 0.0.40
codegen_flags: <defaults>
</compile_context>

<pallas_src>
import jax
import jax.numpy as jnp
from jax.experimental import pallas as pl
from jax.experimental.pallas import tpu as pltpu

MAX_TILE_S = 16384  # cap on voxel tile along the flattened spatial axis (lanes)


# -------------------- fused Pallas kernel --------------------

def fused_mmf_kernel(x_ref, w1_ref, b1_ref, watt_ref, batt_ref,
                     fin_ref, fout_ref, attn_ref):
    """One voxel tile, channel-first layout.

    x_ref    : (C_in,  TILE_S)  input voxels (channels on sublanes)
    w1_ref   : (C_hid, C_in)    1x1x1 stem conv weight
    b1_ref   : (C_hid, 1)       stem bias (column)
    watt_ref : (C_hid, 1)       space_attention 1x1x1 conv weight (column)
    batt_ref : (1,)             space_attention bias (SMEM scalar)
    fin_ref  : (C_hid, TILE_S)  feature_in   (hooked input of mmf[3])
    fout_ref : (C_hid, TILE_S)  feature_out  (hooked output of mmf[3])
    attn_ref : (1,     TILE_S)  attention_map (lane-dense)
    """
    # stem: 1x1x1 conv + ReLU  (small MXU matmul, f32 accumulation)
    f = jnp.dot(w1_ref[...], x_ref[...], preferred_element_type=jnp.float32)
    f = jnp.maximum(f + b1_ref[...], 0.0)
    fin_ref[...] = f

    # space_attention: VPU multiply + sublane reduce (bias from SMEM scalar)
    logits = jnp.sum(f * watt_ref[...], axis=0, keepdims=True) + batt_ref[0]
    a = jax.nn.sigmoid(logits)          # (1, TILE_S)
    attn_ref[...] = a

    # mmf[3] output: features gated by the spatial attention map.
    # Re-read fin's output buffer instead of keeping `f` live -> avoids a
    # second (C_hid, TILE_S) f32 VMEM temporary at large tile sizes.
    fout_ref[...] = fin_ref[...] * a


# -------------------- wrapper --------------------

def _pick_tile(S):
    """Lane-dim tile (multiple of 128) for the flattened voxel axis.

    Big tiles amortize per-grid-step pipeline overhead in this write-bound
    kernel; capped at MAX_TILE_S (~9-10 MiB double-buffered VMEM).  If the
    whole (128-rounded) axis fits in one tile, split into two grid steps so
    v7x's two TensorCores both get work.
    """
    s128 = pl.cdiv(S, 128) * 128
    tile = min(MAX_TILE_S, s128)
    if tile == s128 and s128 >= 256:
        tile = pl.cdiv(s128 // 2, 128) * 128
    return tile


def run_fused(x2d, w1, b1_col, watt_col, b_att, tile_s):
    C_in, S = x2d.shape
    C_hid = w1.shape[0]
    assert S % tile_s == 0, "voxel axis must be padded to a multiple of tile_s"
    grid = (S // tile_s,)
    return pl.pallas_call(
        fused_mmf_kernel,
        out_shape=(
            jax.ShapeDtypeStruct((C_hid, S), jnp.float32),  # feature_in
            jax.ShapeDtypeStruct((C_hid, S), jnp.float32),  # feature_out
            jax.ShapeDtypeStruct((1, S), jnp.float32),      # attention_map
        ),
        grid_spec=pltpu.PrefetchScalarGridSpec(
            num_scalar_prefetch=0,
            grid=grid,
            in_specs=[
                pl.BlockSpec((C_in, tile_s), lambda i: (0, i)),
                pl.BlockSpec((C_hid, C_in), lambda i: (0, 0)),
                pl.BlockSpec((C_hid, 1), lambda i: (0, 0)),
                pl.BlockSpec((C_hid, 1), lambda i: (0, 0)),
                pl.BlockSpec(memory_space=pltpu.MemorySpace.SMEM),  # b_att scalar
            ],
            out_specs=[
                pl.BlockSpec((C_hid, tile_s), lambda i: (0, i)),
                pl.BlockSpec((C_hid, tile_s), lambda i: (0, i)),
                pl.BlockSpec((1, tile_s), lambda i: (0, i)),
            ],
        ),
        compiler_params=pltpu.CompilerParams(
            dimension_semantics=("parallel",)),
    )(x2d, w1, b1_col, watt_col, b_att)


def hook_no_window_forward(x, params):
    """Mirrors HookNoWindow.forward: crop volume, add batch dim, run network,
    return (feature_in, feature_out, attention_map) as captured by the hooks
    (torch.squeeze'd, i.e. batch / singleton channel dims removed)."""
    # crop; no-op at small shapes, clamps like torch slicing
    x = x[:, 0:128, 0:128, 0:128]
    C_in, D, H, W = x.shape
    S = D * H * W

    # channel-first flattening -> (C_in, S); NCDHW already has channels
    # leading, so this is a pure reshape (no transpose / HBM copy).
    x2d = x.reshape(C_in, S)

    tile_s = _pick_tile(S)

    # Pad the voxel axis only if the tile does not divide it (no-op at the
    # demo size and at the cropped 128^3 production size); padded columns are
    # sliced off below.
    S_pad = pl.cdiv(S, tile_s) * tile_s
    if S_pad != S:
        x2d = jnp.pad(x2d, ((0, 0), (0, S_pad - S)))

    C_hid = params["w1"].shape[0]
    b1_col = params["b1"].reshape(C_hid, 1)
    watt_col = params["w_att"].reshape(C_hid, 1)
    b_att = params["b_att"].reshape(1)

    fin2d, fout2d, attn2d = run_fused(
        x2d, params["w1"], b1_col, watt_col, b_att, tile_s)

    if S_pad != S:
        fin2d = fin2d[:, :S]
        fout2d = fout2d[:, :S]
        attn2d = attn2d[:, :S]

    # torch.squeeze of (1, C_hid, D, H, W) -> (C_hid, D, H, W);
    # of (1, 1, D, H, W) -> (D, H, W). Channel-first layout makes these plain
    # reshapes (no transposes).
    feature_in = fin2d.reshape(C_hid, D, H, W)
    feature_out = fout2d.reshape(C_hid, D, H, W)
    attention_map = attn2d.reshape(D, H, W)
    return feature_in, feature_out, attention_map
    # TODO(synk): hooks on an arbitrary user-supplied `network` cannot be
    # reproduced generically; a representative synthetic MMF block is used.


if __name__ == "__main__":
    key = jax.random.PRNGKey(0)
    k_x, k_w1, k_b1, k_wa, k_ba = jax.random.split(key, 5)

    C_in, D, H, W = 4, 8, 16, 16       # small volume; forward crops to <=128^3
    C_hid = 32

    x = jax.random.normal(k_x, (C_in, D, H, W), dtype=jnp.float32)

    params = {
        # 1x1x1 conv weights in torch (out_channels, in_channels) layout
        "w1": jax.random.normal(k_w1, (C_hid, C_in), dtype=jnp.float32) * 0.1,
        "b1": jax.random.normal(k_b1, (C_hid,), dtype=jnp.float32) * 0.1,
        "w_att": jax.random.normal(k_wa, (1, C_hid), dtype=jnp.float32) * 0.1,
        "b_att": jax.random.normal(k_ba, (1,), dtype=jnp.float32) * 0.1,
    }

    feature_in, feature_out, attention_map = hook_no_window_forward(x, params)
    jax.block_until_ready((feature_in, feature_out, attention_map))

    # sanity checks against a pure-JAX reference (channel-first math)
    S = D * H * W
    x2d = x.reshape(C_in, S)
    f_ref = jnp.maximum(params["w1"] @ x2d + params["b1"][:, None], 0.0)
    a_ref = jax.nn.sigmoid(params["w_att"] @ f_ref + params["b_att"][:, None])
    o_ref = f_ref * a_ref

    assert feature_in.shape == (C_hid, D, H, W)
    assert feature_out.shape == (C_hid, D, H, W)
    assert attention_map.shape == (D, H, W)
    assert jnp.allclose(feature_in, f_ref.reshape(C_hid, D, H, W), atol=1e-5)
    assert jnp.allclose(feature_out, o_ref.reshape(C_hid, D, H, W), atol=1e-5)
    assert jnp.allclose(attention_map, a_ref.reshape(D, H, W), atol=1e-5)

    print("KERNEL_OK")
</pallas_src>

<mosaic_0001>
module attributes {stable_mosaic.version = 11 : i64} {
  func.func @fused_mmf_kernel(%arg0: i32, %arg1: memref<4x1024xf32, #tpu.memory_space<vmem>>, %arg2: memref<32x4xf32, #tpu.memory_space<vmem>>, %arg3: memref<32x1xf32, #tpu.memory_space<vmem>>, %arg4: memref<32x1xf32, #tpu.memory_space<vmem>>, %arg5: memref<1xf32, #tpu.memory_space<smem>>, %arg6: memref<32x1024xf32, #tpu.memory_space<vmem>>, %arg7: memref<32x1024xf32, #tpu.memory_space<vmem>>, %arg8: memref<1x1024xf32, #tpu.memory_space<vmem>>) attributes {dimension_semantics = [#tpu.dimension_semantics<parallel>], iteration_bounds = array<i64: 2>, scalar_prefetch = 0 : i64, scratch_operands = 0 : i64, tpu.core_type = #tpu.core_type<tc>, window_params = [{transform_indices = @transform_0, window_bounds = array<i64: 4, 1024>}, {pipeline_mode = #tpu.pipeline_mode<synchronous>, transform_indices = @transform_1, window_bounds = array<i64: 32, 4>}, {pipeline_mode = #tpu.pipeline_mode<synchronous>, transform_indices = @transform_2, window_bounds = array<i64: 32, 1>}, {pipeline_mode = #tpu.pipeline_mode<synchronous>, transform_indices = @transform_3, window_bounds = array<i64: 32, 1>}, {transform_indices = @transform_4, window_bounds = array<i64: 1>}, {transform_indices = @transform_5, window_bounds = array<i64: 32, 1024>}, {transform_indices = @transform_6, window_bounds = array<i64: 32, 1024>}, {transform_indices = @transform_7, window_bounds = array<i64: 1, 1024>}]} {
    %c0 = arith.constant 0 : index
    %c0_0 = arith.constant 0 : index
    %0 = vector.load %arg2[%c0, %c0_0] : memref<32x4xf32, #tpu.memory_space<vmem>>, vector<32x4xf32>
    %c0_1 = arith.constant 0 : index
    %c0_2 = arith.constant 0 : index
    %1 = vector.load %arg1[%c0_1, %c0_2] : memref<4x1024xf32, #tpu.memory_space<vmem>>, vector<4x1024xf32>
    %cst = arith.constant dense<0.000000e+00> : vector<32x1024xf32>
    %2 = tpu.matmul %0, %1, %cst {dimension_numbers = #tpu.dot_dimension_numbers<[1], [0], [0], [1], [0, 0, 1, 1], [], []>} : vector<32x4xf32>, vector<4x1024xf32>, vector<32x1024xf32> -> vector<32x1024xf32>
    %c0_3 = arith.constant 0 : index
    %c0_4 = arith.constant 0 : index
    %3 = vector.load %arg3[%c0_3, %c0_4] : memref<32x1xf32, #tpu.memory_space<vmem>>, vector<32x1xf32>
    %4 = vector.broadcast %3 : vector<32x1xf32> to vector<32x1024xf32>
    %5 = arith.addf %2, %4 : vector<32x1024xf32>
    %cst_5 = arith.constant 0.000000e+00 : f32
    %6 = vector.broadcast %cst_5 : f32 to vector<32x1024xf32>
    %7 = arith.maximumf %5, %6 : vector<32x1024xf32>
    %c0_6 = arith.constant 0 : index
    %c0_7 = arith.constant 0 : index
    %8 = vector.load %arg6[%c0_6, %c0_7] : memref<32x1024xf32, #tpu.memory_space<vmem>>, vector<32x1024xf32>
    tpu.vector_store %arg6[%c0_6, %c0_7], %7 {strides = array<i32>} : memref<32x1024xf32, #tpu.memory_space<vmem>>, vector<32x1024xf32>,
    %c0_8 = arith.constant 0 : index
    %c0_9 = arith.constant 0 : index
    %9 = vector.load %arg4[%c0_8, %c0_9] : memref<32x1xf32, #tpu.memory_space<vmem>>, vector<32x1xf32>
    %10 = vector.broadcast %9 : vector<32x1xf32> to vector<32x1024xf32>
    %11 = arith.mulf %7, %10 : vector<32x1024xf32>
    %cst_10 = arith.constant dense<0.000000e+00> : vector<1024xf32>
    %12 = vector.multi_reduction <add>, %11, %cst_10 [0] : vector<32x1024xf32> to vector<1024xf32>
    %13 = vector.shape_cast %12 : vector<1024xf32> to vector<1x1024xf32>
    %c0_11 = arith.constant 0 : index
    %14 = memref.load %arg5[%c0_11] : memref<1xf32, #tpu.memory_space<smem>>
    %15 = vector.broadcast %14 : f32 to vector<1x1024xf32>
    %16 = arith.addf %13, %15 : vector<1x1024xf32>
    %17 = arith.negf %16 : vector<1x1024xf32>
    %18 = math.exp %17 : vector<1x1024xf32>
    %cst_12 = arith.constant 1.000000e+00 : f32
    %19 = vector.broadcast %cst_12 : f32 to vector<1x1024xf32>
    %20 = arith.addf %19, %18 : vector<1x1024xf32>
    %21 = arith.divf %19, %20 : vector<1x1024xf32>
    %c0_13 = arith.constant 0 : index
    %c0_14 = arith.constant 0 : index
    %22 = vector.load %arg8[%c0_13, %c0_14] : memref<1x1024xf32, #tpu.memory_space<vmem>>, vector<1x1024xf32>
    tpu.vector_store %arg8[%c0_13, %c0_14], %21 {strides = array<i32>} : memref<1x1024xf32, #tpu.memory_space<vmem>>, vector<1x1024xf32>,
    %c0_15 = arith.constant 0 : index
    %c0_16 = arith.constant 0 : index
    %23 = vector.load %arg6[%c0_15, %c0_16] : memref<32x1024xf32, #tpu.memory_space<vmem>>, vector<32x1024xf32>
    %24 = vector.broadcast %21 : vector<1x1024xf32> to vector<32x1024xf32>
    %25 = arith.mulf %23, %24 : vector<32x1024xf32>
    %c0_17 = arith.constant 0 : index
    %c0_18 = arith.constant 0 : index
    %26 = vector.load %arg7[%c0_17, %c0_18] : memref<32x1024xf32, #tpu.memory_space<vmem>>, vector<32x1024xf32>
    tpu.vector_store %arg7[%c0_17, %c0_18], %25 {strides = array<i32>} : memref<32x1024xf32, #tpu.memory_space<vmem>>, vector<32x1024xf32>,
    return
  }
  func.func @transform_0(%arg0: i32) -> (i32, i32) {
    %c0_i32 = arith.constant 0 : i32
    %c0_i32_0 = arith.constant 0 : i32
    return %c0_i32, %arg0 : i32, i32
  }
  func.func @transform_1(%arg0: i32) -> (i32, i32) {
    %c0_i32 = arith.constant 0 : i32
    %c0_i32_0 = arith.constant 0 : i32
    %c0_i32_1 = arith.constant 0 : i32
    return %c0_i32, %c0_i32_0 : i32, i32
  }
  func.func @transform_2(%arg0: i32) -> (i32, i32) {
    %c0_i32 = arith.constant 0 : i32
    %c0_i32_0 = arith.constant 0 : i32
    %c0_i32_1 = arith.constant 0 : i32
    return %c0_i32, %c0_i32_0 : i32, i32
  }
  func.func @transform_3(%arg0: i32) -> (i32, i32) {
    %c0_i32 = arith.constant 0 : i32
    %c0_i32_0 = arith.constant 0 : i32
    %c0_i32_1 = arith.constant 0 : i32
    return %c0_i32, %c0_i32_0 : i32, i32
  }
  func.func @transform_4(%arg0: i32) -> i32 {
    %c0_i32 = arith.constant 0 : i32
    %c0_i32_0 = arith.constant 0 : i32
    return %c0_i32 : i32
  }
  func.func @transform_5(%arg0: i32) -> (i32, i32) {
    %c0_i32 = arith.constant 0 : i32
    %c0_i32_0 = arith.constant 0 : i32
    return %c0_i32, %arg0 : i32, i32
  }
  func.func @transform_6(%arg0: i32) -> (i32, i32) {
    %c0_i32 = arith.constant 0 : i32
    %c0_i32_0 = arith.constant 0 : i32
    return %c0_i32, %arg0 : i32, i32
  }
  func.func @transform_7(%arg0: i32) -> (i32, i32) {
    %c0_i32 = arith.constant 0 : i32
    %c0_i32_0 = arith.constant 0 : i32
    return %c0_i32, %arg0 : i32, i32
  }
}

</mosaic_0001>

<llo_original>
// kernel: tpu_custom_call.1
$region0: #{tpu_custom_call.1}
  #allocation0 [shape = 'u32[]', space=smem, size = 0x4, offset = 0x4, fixed_abs, tag = 'smem constant byte address 0x4 - core index']
  #allocation1 [shape = 'u32[144,128]{1,0:T(1,128)}', space=vmem, size = 0x12000, scoped, tag = 'internal scratch']
  #allocation2 [shape = 'f32[1]{0:T(128)S(6)}', space=smem, size = 0x200, scoped, tag = 'scoped memory for tpu_custom_call.1']
  %s0 = inlined_call_operand.vmem [shape: f32[4,2048], index: 0, kind: input, shape index: {}]
  %s1 = inlined_call_operand.vmem [shape: f32[32,4], index: 1, kind: input, shape index: {}]
  %s2 = inlined_call_operand.vmem [shape: f32[32,1], index: 2, kind: input, shape index: {}]
  %s3 = inlined_call_operand.vmem [shape: f32[32,1], index: 3, kind: input, shape index: {}]
  %s4 = inlined_call_operand.<no memory space> [shape: f32[1], index: 4, kind: input, shape index: {}]
  %s5 = inlined_call_operand.hbm [shape: f32[32,2048], index: 5, kind: output, shape index: {0}]
  %s6 = inlined_call_operand.hbm [shape: f32[32,2048], index: 6, kind: output, shape index: {1}]
  %s7 = inlined_call_operand.hbm [shape: f32[1,2048], index: 7, kind: output, shape index: {2}]
  %8 = xla_tuple %s5, %s6, %s7
  %s9 = sld [smem:[#allocation0]]
  $region69: #{tpu_custom_call.1} parent=0
    _
  %s11 = ssub.s32 1, %s9
  %s12 = scalar_select 0, %s11, %s9
  %13 = sst [smem:[#allocation2]] %s4
  $region1: #{tpu_custom_call.1} parent=0
    #allocation3 [shape = 'u8[262144]{0}', space=vmem, size = 0x40000, scoped, tag = 'output window, operand 0']
    #allocation4 [shape = 's32[2]{0}', space=sflag, size = 0x8, scoped, tag = 'scoped memory for tpu_custom_call.1']
    #allocation5 [shape = 'u8[262144]{0}', space=vmem, size = 0x40000, scoped, tag = 'output window, operand 1']
    #allocation6 [shape = 's32[2]{0}', space=sflag, size = 0x8, scoped, tag = 'scoped memory for tpu_custom_call.1']
    #allocation7 [shape = 'u8[8192]{0}', space=vmem, size = 0x2000, scoped, tag = 'output window, operand 2']
    %14 = vsyncpa [#allocation4], 0
    %s15 = scalar_lea.sflag [#allocation4], 1
    %16 = vsyncpa %s15, 0
    %17 = vsyncpa [#allocation6], 0
    %s18 = scalar_lea.sflag [#allocation6], 1
    %19 = vsyncpa %s18, 0
    loop: start=0, step=1, limit=4
    $region2: #{tpu_custom_call.1} parent=1 // loop_pre_header
      _
    $region3: #{tpu_custom_call.1} parent=1 // loop_header
      %s21 = sphi 0, %s25
      %p22 = scmp.ge.s32.totalorder %s21, 4
      %s31 = sphi 0, %s33
      %s34 = sphi 0, %s31
      %s35 = sphi 0, %s34
      %s51 = sphi 0, %s35
      %s55 = sphi 0, %s55
      %s57 = sphi 0, %s55
      %s58 = sphi 0, %s57
      %s72 = sphi 0, %s58
      %s76 = sphi 0, %s76
      %s78 = sphi 0, %s76
      %s79 = sphi 0, %s78
      %s93 = sphi 0, %s79
      %s97 = sphi 0, %s97
      %s99 = sphi 0, %s97
      %s100 = sphi 0, %s99
      %s114 = sphi 0, %s100
      %s118 = sphi 0, %s118
      %s120 = sphi 0, %s118
      %s121 = sphi 0, %s120
      %s135 = sphi 0, %s121
      %s141 = sphi 0, %s143
      %s144 = sphi 0, %s141
      %s145 = sphi 0, %s144
      %s161 = sphi 0, %s145
      %s167 = sphi 0, %s169
      %s170 = sphi 0, %s167
      %s171 = sphi 0, %s170
      %s187 = sphi 0, %s171
      %s193 = sphi 0, %s195
      %s196 = sphi 0, %s193
      %s197 = sphi 0, %s196
      %s213 = sphi 0, %s197
    $region4: #{tpu_custom_call.1} parent=1 // loop_header_branch
      %24 = sbr.rel (%p22) target = $region8
    $region5: #{tpu_custom_call.1} parent=1 // loop_body
      %s26 = ssub.s32 %s21, 1
      %s27 = ssub.s32 %s21, 2
      %s28 = sadd.s32 %s21, 1
      %s29 = ssub.s32 %s21, %s28
      %p30 = scmp.eq.s32.totalorder %s29, 0
      %s32 = sadd.s32 %s31, 1
      %s33 = scalar_select %p30, %s31, %s32
      %p36 = pneg %p30
      %p37 = scmp.eq.s32.totalorder %s21, 1
      %p38 = por %p36, %p37
      %p39 = scmp.ne.s32.totalorder %s31, %s34
      %p40 = scmp.eq.s32.totalorder %s21, 0
      %p41 = por %p39, %p40
      %p42 = scmp.ne.s32.totalorder %s31, %s34
      %p43 = scmp.eq.s32.totalorder %s26, 1
      %p44 = por %p42, %p43
      %p45 = scmp.ne.s32.totalorder %s34, %s35
      %p46 = scmp.eq.s32.totalorder %s26, 0
      %p47 = por %p45, %p46
      %p48 = scmp.ne.s32.totalorder %s34, %s35
      %p49 = scmp.eq.s32.totalorder %s27, 1
      %p50 = por %p48, %p49
      %p52 = scmp.ne.s32.totalorder %s35, %s51
      %p53 = scmp.eq.s32.totalorder %s27, 0
      %p54 = por %p52, %p53
      %s56 = sadd.s32 %s55, 1
      %p59 = scmp.eq.s32.totalorder %s21, 1
      %p60 = scmp.ne.s32.totalorder %s55, %s57
      %p61 = scmp.eq.s32.totalorder %s21, 0
      %p62 = por %p60, %p61
      %p63 = scmp.ne.s32.totalorder %s55, %s57
      %p64 = scmp.eq.s32.totalorder %s26, 1
      %p65 = por %p63, %p64
      %p66 = scmp.ne.s32.totalorder %s57, %s58
      %p67 = scmp.eq.s32.totalorder %s26, 0
      %p68 = por %p66, %p67
      %p69 = scmp.ne.s32.totalorder %s57, %s58
      %p70 = scmp.eq.s32.totalorder %s27, 1
      %p71 = por %p69, %p70
      %p73 = scmp.ne.s32.totalorder %s58, %s72
      %p74 = scmp.eq.s32.totalorder %s27, 0
      %p75 = por %p73, %p74
      %s77 = sadd.s32 %s76, 1
      %p80 = scmp.eq.s32.totalorder %s21, 1
      %p81 = scmp.ne.s32.totalorder %s76, %s78
      %p82 = scmp.eq.s32.totalorder %s21, 0
      %p83 = por %p81, %p82
      %p84 = scmp.ne.s32.totalorder %s76, %s78
      %p85 = scmp.eq.s32.totalorder %s26, 1
      %p86 = por %p84, %p85
      %p87 = scmp.ne.s32.totalorder %s78, %s79
      %p88 = scmp.eq.s32.totalorder %s26, 0
      %p89 = por %p87, %p88
      %p90 = scmp.ne.s32.totalorder %s78, %s79
      %p91 = scmp.eq.s32.totalorder %s27, 1
      %p92 = por %p90, %p91
      %p94 = scmp.ne.s32.totalorder %s79, %s93
      %p95 = scmp.eq.s32.totalorder %s27, 0
      %p96 = por %p94, %p95
      %s98 = sadd.s32 %s97, 1
      %p101 = scmp.eq.s32.totalorder %s21, 1
      %p102 = scmp.ne.s32.totalorder %s97, %s99
      %p103 = scmp.eq.s32.totalorder %s21, 0
      %p104 = por %p102, %p103
      %p105 = scmp.ne.s32.totalorder %s97, %s99
      %p106 = scmp.eq.s32.totalorder %s26, 1
      %p107 = por %p105, %p106
      %p108 = scmp.ne.s32.totalorder %s99, %s100
      %p109 = scmp.eq.s32.totalorder %s26, 0
      %p110 = por %p108, %p109
      %p111 = scmp.ne.s32.totalorder %s99, %s100
      %p112 = scmp.eq.s32.totalorder %s27, 1
      %p113 = por %p111, %p112
      %p115 = scmp.ne.s32.totalorder %s100, %s114
      %p116 = scmp.eq.s32.totalorder %s27, 0
      %p117 = por %p115, %p116
      %s119 = sadd.s32 %s118, 1
      %p122 = scmp.eq.s32.totalorder %s21, 1
      %p123 = scmp.ne.s32.totalorder %s118, %s120
      %p124 = scmp.eq.s32.totalorder %s21, 0
      %p125 = por %p123, %p124
      %p126 = scmp.ne.s32.totalorder %s118, %s120
      %p127 = scmp.eq.s32.totalorder %s26, 1
      %p128 = por %p126, %p127
      %p129 = scmp.ne.s32.totalorder %s120, %s121
      %p130 = scmp.eq.s32.totalorder %s26, 0
      %p131 = por %p129, %p130
      %p132 = scmp.ne.s32.totalorder %s120, %s121
      %p133 = scmp.eq.s32.totalorder %s27, 1
      %p134 = por %p132, %p133
      %p136 = scmp.ne.s32.totalorder %s121, %s135
      %p137 = scmp.eq.s32.totalorder %s27, 0
      %p138 = por %p136, %p137
      %s139 = ssub.s32 %s21, %s28
      %p140 = scmp.eq.s32.totalorder %s139, 0
      %s142 = sadd.s32 %s141, 1
      %s143 = scalar_select %p140, %s141, %s142
      %p146 = pneg %p140
      %p147 = scmp.eq.s32.totalorder %s21, 1
      %p148 = por %p146, %p147
      %p149 = scmp.ne.s32.totalorder %s141, %s144
      %p150 = scmp.eq.s32.totalorder %s21, 0
      %p151 = por %p149, %p150
      %p152 = scmp.ne.s32.totalorder %s141, %s144
      %p153 = scmp.eq.s32.totalorder %s26, 1
      %p154 = por %p152, %p153
      %p155 = scmp.ne.s32.totalorder %s144, %s145
      %p156 = scmp.eq.s32.totalorder %s26, 0
      %p157 = por %p155, %p156
      %p158 = scmp.ne.s32.totalorder %s144, %s145
      %p159 = scmp.eq.s32.totalorder %s27, 1
      %p160 = por %p158, %p159
      %p162 = scmp.ne.s32.totalorder %s145, %s161
      %p163 = scmp.eq.s32.totalorder %s27, 0
      %p164 = por %p162, %p163
      %s165 = ssub.s32 %s21, %s28
      %p166 = scmp.eq.s32.totalorder %s165, 0
      %s168 = sadd.s32 %s167, 1
      %s169 = scalar_select %p166, %s167, %s168
      %p172 = pneg %p166
      %p173 = scmp.eq.s32.totalorder %s21, 1
      %p174 = por %p172, %p173
      %p175 = scmp.ne.s32.totalorder %s167, %s170
      %p176 = scmp.eq.s32.totalorder %s21, 0
      %p177 = por %p175, %p176
      %p178 = scmp.ne.s32.totalorder %s167, %s170
      %p179 = scmp.eq.s32.totalorder %s26, 1
      %p180 = por %p178, %p179
      %p181 = scmp.ne.s32.totalorder %s170, %s171
      %p182 = scmp.eq.s32.totalorder %s26, 0
      %p183 = por %p181, %p182
      %p184 = scmp.ne.s32.totalorder %s170, %s171
      %p185 = scmp.eq.s32.totalorder %s27, 1
      %p186 = por %p184, %p185
      %p188 = scmp.ne.s32.totalorder %s171, %s187
      %p189 = scmp.eq.s32.totalorder %s27, 0
      %p190 = por %p188, %p189
      %s191 = ssub.s32 %s21, %s28
      %p192 = scmp.eq.s32.totalorder %s191, 0
      %s194 = sadd.s32 %s193, 1
      %s195 = scalar_select %p192, %s193, %s194
      %p198 = pneg %p192
      %p199 = scmp.eq.s32.totalorder %s21, 1
      %p200 = por %p198, %p199
      %p201 = scmp.ne.s32.totalorder %s193, %s196
      %p202 = scmp.eq.s32.totalorder %s21, 0
      %p203 = por %p201, %p202
      %p204 = scmp.ne.s32.totalorder %s193, %s196
      %p205 = scmp.eq.s32.totalorder %s26, 1
      %p206 = por %p204, %p205
      %p207 = scmp.ne.s32.totalorder %s196, %s197
      %p208 = scmp.eq.s32.totalorder %s26, 0
      %p209 = por %p207, %p208
      %p210 = scmp.ne.s32.totalorder %s196, %s197
      %p211 = scmp.eq.s32.totalorder %s27, 1
      %p212 = por %p210, %p211
      %p214 = scmp.ne.s32.totalorder %s197, %s213
      %p215 = scmp.eq.s32.totalorder %s27, 0
      %p216 = por %p214, %p215
      %p217 = scmp.le.s32.totalorder 1, %s21
      %p218 = scmp.lt.s32.totalorder %s21, 3
      %p219 = pnand %p217, %p218
      %p220 = pneg %p219
      // Predicated region
      $region9: #{tpu_custom_call.1} parent=5 // pred_check
        _
      $region10: #{tpu_custom_call.1} parent=5 // pred_check_branch
        %222 = sbr.rel (%p219) target = $region12
      $region11: #{tpu_custom_call.1} parent=5 // pred_region
        %s223 = ssub.s32 %s21, 1
        // Predicated region
        $region13: #{tpu_custom_call.1} parent=11 // pred_check
          %p224 = pneg %p68
        $region14: #{tpu_custom_call.1} parent=11 // pred_check_branch
          %226 = sbr.rel (%p224) target = $region16
        $region15: #{tpu_custom_call.1} parent=11 // pred_region
          _
        $region16: #{tpu_custom_call.1} parent=11 // pred_fallthru
          _
        // Predicated region
        $region17: #{tpu_custom_call.1} parent=11 // pred_check
          %p227 = pneg %p89
        $region18: #{tpu_custom_call.1} parent=11 // pred_check_branch
          %229 = sbr.rel (%p227) target = $region20
        $region19: #{tpu_custom_call.1} parent=11 // pred_region
          _
        $region20: #{tpu_custom_call.1} parent=11 // pred_fallthru
          _
        // Predicated region
        $region21: #{tpu_custom_call.1} parent=11 // pred_check
          %p230 = pneg %p110
        $region22: #{tpu_custom_call.1} parent=11 // pred_check_branch
          %232 = sbr.rel (%p230) target = $region24
        $region23: #{tpu_custom_call.1} parent=11 // pred_region
          _
        $region24: #{tpu_custom_call.1} parent=11 // pred_fallthru
          _
        // Predicated region
        $region25: #{tpu_custom_call.1} parent=11 // pred_check
          %p233 = pneg %p131
        $region26: #{tpu_custom_call.1} parent=11 // pred_check_branch
          %235 = sbr.rel (%p233) target = $region28
        $region27: #{tpu_custom_call.1} parent=11 // pred_region
          _
        $region28: #{tpu_custom_call.1} parent=11 // pred_fallthru
          _
      $region12: #{tpu_custom_call.1} parent=5 // pred_fallthru
        _
      %p236 = scmp.lt.s32.totalorder %s21, 2
      // Predicated region
      $region29: #{tpu_custom_call.1} parent=5 // pred_check
        %p237 = pneg %p236
      $region30: #{tpu_custom_call.1} parent=5 // pred_check_branch
        %239 = sbr.rel (%p237) target = $region32
      $region31: #{tpu_custom_call.1} parent=5 // pred_region
        // Predicated region
        $region33: #{tpu_custom_call.1} parent=31 // pred_check
          %p240 = pneg %p41
        $region34: #{tpu_custom_call.1} parent=31 // pred_check_branch
          %242 = sbr.rel (%p240) target = $region36
        $region35: #{tpu_custom_call.1} parent=31 // pred_region
          %s243 = smul.u32 8, %s21
          %p244 = scmp.lt.s32.totalorder %s243, 15
          %s245 = scalar_select %p244, %s243, 15
          %s246 = smul.addr %s245, 4
          %s247 = scalar_lea.vmem %s0, %s246
          %s248 = smul.u32 8, %s21
        $region36: #{tpu_custom_call.1} parent=31 // pred_fallthru
          _
      $region32: #{tpu_custom_call.1} parent=5 // pred_fallthru
        _
      %p249 = scmp.le.s32.totalorder 1, %s21
      %p250 = scmp.lt.s32.totalorder %s21, 3
      %p251 = pnand %p249, %p250
      %p252 = pneg %p251
      // Predicated region
      $region37: #{tpu_custom_call.1} parent=5 // pred_check
        _
      $region38: #{tpu_custom_call.1} parent=5 // pred_check_branch
        %254 = sbr.rel (%p251) target = $region40
      $region39: #{tpu_custom_call.1} parent=5 // pred_region
        %s255 = ssub.s32 %s21, 1
        %s256 = smul.u32 8, %s26
        %p257 = scmp.lt.s32.totalorder %s256, 15
        %s258 = scalar_select %p257, %s256, 15
        %s259 = smul.addr %s258, 4
        %s260 = scalar_lea.vmem %s0, %s259
        %p261 = pneg %p47
        %p262 = pneg %p44
        %p263 = pneg %p68
        %p264 = pneg %p65
        %p265 = pneg %p89
        %p266 = pneg %p86
        %p267 = pneg %p110
        %p268 = pneg %p107
        %p269 = pneg %p131
        %p270 = pneg %p128
        %p271 = pneg %p157
        %p272 = pneg %p154
        %s273 = sand.u32 %s144, 1
        %s274 = scalar_lea.sflag [#allocation4], %s273
        %s275 = sand.u32 %s144, 1
        %s276 = smul.addr %s275, 256
        %s277 = scalar_lea.vmem [#allocation3], %s276
        %p278 = pneg %p183
        %p279 = pneg %p180
        %s280 = sand.u32 %s26, 1
        %s281 = scalar_lea.sflag [#allocation6], %s280
        %s282 = sand.u32 %s170, 1
        %s283 = smul.addr %s282, 256
        %s284 = scalar_lea.vmem [#allocation5], %s283
        %p285 = pneg %p209
        %p286 = pneg %p206
        %s287 = sand.u32 %s26, 1
        %s288 = scalar_lea.sflag [#allocation6], %s287
        %s289 = sand.u32 %s196, 1
        %s290 = smul.addr %s289, 8
        %s291 = scalar_lea.vmem [#allocation7], %s290
        %s292 = smul.u32 8, %s26
        %p293 = scmp.lt.s32.totalorder %s292, 15
        %s294 = scalar_select %p293, %s292, 15
        %s295 = smul.addr %s294, 4
        %s296 = scalar_lea.vmem %s0, %s295
        %s297 = smul.u32 8, %s26
        %s298 = smul.u32 8, %s26
        %s299 = smul.u32 8, %s26
        %s300 = smul.u32 8, %s26
        %v301 = vld [vmem:[%s1] sm:$0xff]
        %v302 = vld [vmem:[%s1 + $0x8] sm:$0xff]
        %v303 = vld [vmem:[%s1 + $0x10] sm:$0xff]
        %v304 = vld [vmem:[%s1 + $0x18] sm:$0xff]
        %v305 = vld [vmem:[%s296] sm:$0xff]
        %v306 = vld [vmem:[%s296 + $0x8] sm:$0xff]
        %v307 = vld [vmem:[%s296 + $0x10] sm:$0xff]
        %v308 = vld [vmem:[%s296 + $0x18] sm:$0xff]
        %v309 = vld [vmem:[%s2] sm:$0xff]
        %v310 = vld [vmem:[%s2 + $0x8] sm:$0xff]
        %v311 = vld [vmem:[%s2 + $0x10] sm:$0xff]
        %v312 = vld [vmem:[%s2 + $0x18] sm:$0xff]
        %314 = vset.pattern.permute.xlu0 0
        %315 = vperm.xlu0 %314, %v309
        %v316 = vpop.permute.xlu0 %315
        %319 = vset.pattern.permute.xlu0 0
        %320 = vperm.xlu0 %319, %v310
        %v321 = vpop.permute.xlu0 %320
        %324 = vset.pattern.permute.xlu0 0
        %325 = vperm.xlu0 %324, %v311
        %v326 = vpop.permute.xlu0 %325
        %329 = vset.pattern.permute.xlu0 0
        %330 = vperm.xlu0 %329, %v312
        %v331 = vpop.permute.xlu0 %330
        %v337 = vcombine.high %v305, %v305
        %v338 = vcombine.high %v306, %v306
        %v339 = vcombine.high %v307, %v307
        %v340 = vcombine.high %v308, %v308
        %vm341 = vcmask 31744
        %v343 = vsel %vm341, %v301, 0
        %v346 = vsel %vm341, %v302, 0
        %v349 = vsel %vm341, %v303, 0
        %v352 = vsel %vm341, %v304, 0
        %vm354 = vcmask 1043456
        %v355 = vsel %vm354, %v305, 0
        %v357 = vsel %vm354, %v337, 0
        %v359 = vsel %vm354, %v306, 0
        %v361 = vsel %vm354, %v338, 0
        %v363 = vsel %vm354, %v307, 0
        %v365 = vsel %vm354, %v339, 0
        %v367 = vsel %vm354, %v308, 0
        %v369 = vsel %vm354, %v340, 0
        %371 = vmatprep.subr.mxu0 0.0
        %372 = vmatpush1.msra.mxu0 0.0
        %373 = vmatprep.subr.mxu0 0.0
        %374 = vmatpush1.msra.mxu0 0.0
        %375 = vmatprep.subr.mxu0 0.0
        %376 = vmatpush1.msra.mxu0 0.0
        %377 = vmatprep.subr.mxu0 0.0
        %378 = vmatpush1.msra.mxu0 0.0
        %379 = vmatprep.subr.mxu0 0.0
        %380 = vmatpush1.msra.mxu0 0.0
        %381 = vmatprep.subr.mxu0 0.0
        %382 = vmatpush1.msra.mxu0 0.0
        %383 = vmatprep.subr.mxu0 0.0
        %384 = vmatpush1.msra.mxu0 0.0
        %385 = vmatprep.subr.mxu0 0.0
        %386 = vmatpush1.msra.mxu0 0.0
        %387 = vmatprep.subr.mxu0 0.0
        %388 = vmatpush1.msra.mxu0 0.0
        %389 = vmatprep.subr.mxu0 0.0
        %390 = vmatpush1.msra.mxu0 0.0
        %391 = vmatprep.subr.mxu0 0.0
        %392 = vmatpush1.msra.mxu0 0.0
        %393 = vmatprep.subr.mxu0 0.0
        %394 = vmatpush1.msra.mxu0 0.0
        %395 = vmatprep.subr.mxu0 0.0
        %396 = vmatpush1.msra.mxu0 0.0
        %397 = vmatprep.subr.mxu0 0.0
        %398 = vmatpush1.msra.mxu0 0.0
        %399 = vmatprep.subr.mxu0 0.0
        %400 = vmatpush1.msra.mxu0 0.0
        %401 = vmatprep.subr.mxu0 %v357
        %402 = vmatpush1.msra.mxu0 %v355
        %403 = vmatprep.subr.mxu0 0.0
        %404 = vmatpush2.msra.mxu0 0.0
        %405 = vmatprep.subr.mxu0 0.0
        %406 = vmatpush2.msra.mxu0 0.0
        %407 = vmatprep.subr.mxu0 0.0
        %408 = vmatpush2.msra.mxu0 0.0
        %409 = vmatprep.subr.mxu0 0.0
        %410 = vmatpush2.msra.mxu0 0.0
        %411 = vmatprep.subr.mxu0 0.0
        %412 = vmatpush2.msra.mxu0 0.0
        %413 = vmatprep.subr.mxu0 0.0
        %414 = vmatpush2.msra.mxu0 0.0
        %415 = vmatprep.subr.mxu0 0.0
        %416 = vmatpush2.msra.mxu0 0.0
        %417 = vmatprep.subr.mxu0 0.0
        %418 = vmatpush2.msra.mxu0 0.0
        %419 = vmatprep.subr.mxu0 0.0
        %420 = vmatpush2.msra.mxu0 0.0
        %421 = vmatprep.subr.mxu0 0.0
        %422 = vmatpush2.msra.mxu0 0.0
        %423 = vmatprep.subr.mxu0 0.0
        %424 = vmatpush2.msra.mxu0 0.0
        %425 = vmatprep.subr.mxu0 0.0
        %426 = vmatpush2.msra.mxu0 0.0
        %427 = vmatprep.subr.mxu0 0.0
        %428 = vmatpush2.msra.mxu0 0.0
        %429 = vmatprep.subr.mxu0 0.0
        %430 = vmatpush2.msra.mxu0 0.0
        %431 = vmatprep.subr.mxu0 0.0
        %432 = vmatpush2.msra.mxu0 0.0
        %433 = vmatprep.subr.mxu0 0.0
        %434 = vmatpush2.msra.mxu0 0.0
        %435 = vmatprep.mubr.f32.mxu0 0.0
        %436 = vmatmul.mubr.f32.gmra.mxu0 %v343
        %v437 = vpop.f32.mrf.mxu0
        %v438 = vadd.f32 %v316, %v437
        %v439 = vpop.f32.mrf.mxu0
        %v440 = vadd.f32 %v316, %v439
        %441 = vmatprep.mubr.f32.mxu0 0.0
        %442 = vmatmul.mubr.f32.gmra.mxu0 %v346
        %v443 = vpop.f32.mrf.mxu0
        %v444 = vadd.f32 %v321, %v443
        %v445 = vpop.f32.mrf.mxu0
        %v446 = vadd.f32 %v321, %v445
        %447 = vmatprep.mubr.f32.mxu0 0.0
        %448 = vmatmul.mubr.f32.gmra.mxu0 %v349
        %v449 = vpop.f32.mrf.mxu0
        %v450 = vadd.f32 %v326, %v449
        %v451 = vpop.f32.mrf.mxu0
        %v452 = vadd.f32 %v326, %v451
        %453 = vmatprep.mubr.f32.mxu0 0.0
        %454 = vmatmul.mubr.f32.gmra.mxu0 %v352
        %v455 = vpop.f32.mrf.mxu0
        %v456 = vadd.f32 %v331, %v455
        %v457 = vpop.f32.mrf.mxu0
        %v458 = vadd.f32 %v331, %v457
        %459 = vdwg.mxu0
        %460 = vmatprep.subr.mxu0 0.0
        %461 = vmatpush1.msra.mxu0 0.0
        %462 = vmatprep.subr.mxu0 0.0
        %463 = vmatpush1.msra.mxu0 0.0
        %464 = vmatprep.subr.mxu0 0.0
        %465 = vmatpush1.msra.mxu0 0.0
        %466 = vmatprep.subr.mxu0 0.0
        %467 = vmatpush1.msra.mxu0 0.0
        %468 = vmatprep.subr.mxu0 0.0
        %469 = vmatpush1.msra.mxu0 0.0
        %470 = vmatprep.subr.mxu0 0.0
        %471 = vmatpush1.msra.mxu0 0.0
        %472 = vmatprep.subr.mxu0 0.0
        %473 = vmatpush1.msra.mxu0 0.0
        %474 = vmatprep.subr.mxu0 0.0
        %475 = vmatpush1.msra.mxu0 0.0
        %476 = vmatprep.subr.mxu0 0.0
        %477 = vmatpush1.msra.mxu0 0.0
        %478 = vmatprep.subr.mxu0 0.0
        %479 = vmatpush1.msra.mxu0 0.0
        %480 = vmatprep.subr.mxu0 0.0
        %481 = vmatpush1.msra.mxu0 0.0
        %482 = vmatprep.subr.mxu0 0.0
        %483 = vmatpush1.msra.mxu0 0.0
        %484 = vmatprep.subr.mxu0 0.0
        %485 = vmatpush1.msra.mxu0 0.0
        %486 = vmatprep.subr.mxu0 0.0
        %487 = vmatpush1.msra.mxu0 0.0
        %488 = vmatprep.subr.mxu0 0.0
        %489 = vmatpush1.msra.mxu0 0.0
        %490 = vmatprep.subr.mxu0 %v361
        %491 = vmatpush1.msra.mxu0 %v359
        %492 = vmatprep.subr.mxu0 0.0
        %493 = vmatpush2.msra.mxu0 0.0
        %494 = vmatprep.subr.mxu0 0.0
        %495 = vmatpush2.msra.mxu0 0.0
        %496 = vmatprep.subr.mxu0 0.0
        %497 = vmatpush2.msra.mxu0 0.0
        %498 = vmatprep.subr.mxu0 0.0
        %499 = vmatpush2.msra.mxu0 0.0
        %500 = vmatprep.subr.mxu0 0.0
        %501 = vmatpush2.msra.mxu0 0.0
        %502 = vmatprep.subr.mxu0 0.0
        %503 = vmatpush2.msra.mxu0 0.0
        %504 = vmatprep.subr.mxu0 0.0
        %505 = vmatpush2.msra.mxu0 0.0
        %506 = vmatprep.subr.mxu0 0.0
        %507 = vmatpush2.msra.mxu0 0.0
        %508 = vmatprep.subr.mxu0 0.0
        %509 = vmatpush2.msra.mxu0 0.0
        %510 = vmatprep.subr.mxu0 0.0
        %511 = vmatpush2.msra.mxu0 0.0
        %512 = vmatprep.subr.mxu0 0.0
        %513 = vmatpush2.msra.mxu0 0.0
        %514 = vmatprep.subr.mxu0 0.0
        %515 = vmatpush2.msra.mxu0 0.0
        %516 = vmatprep.subr.mxu0 0.0
        %517 = vmatpush2.msra.mxu0 0.0
        %518 = vmatprep.subr.mxu0 0.0
        %519 = vmatpush2.msra.mxu0 0.0
        %520 = vmatprep.subr.mxu0 0.0
        %521 = vmatpush2.msra.mxu0 0.0
        %522 = vmatprep.subr.mxu0 0.0
        %523 = vmatpush2.msra.mxu0 0.0
        %524 = vmatprep.mubr.f32.mxu0 0.0
        %525 = vmatmul.mubr.f32.gmra.mxu0 %v343
        %v526 = vpop.f32.mrf.mxu0
        %v527 = vadd.f32 %v316, %v526
        %v528 = vpop.f32.mrf.mxu0
        %v529 = vadd.f32 %v316, %v528
        %530 = vmatprep.mubr.f32.mxu0 0.0
        %531 = vmatmul.mubr.f32.gmra.mxu0 %v346
        %v532 = vpop.f32.mrf.mxu0
        %v533 = vadd.f32 %v321, %v532
        %v534 = vpop.f32.mrf.mxu0
        %v535 = vadd.f32 %v321, %v534
        %536 = vmatprep.mubr.f32.mxu0 0.0
        %537 = vmatmul.mubr.f32.gmra.mxu0 %v349
        %v538 = vpop.f32.mrf.mxu0
        %v539 = vadd.f32 %v326, %v538
        %v540 = vpop.f32.mrf.mxu0
        %v541 = vadd.f32 %v326, %v540
        %542 = vmatprep.mubr.f32.mxu0 0.0
        %543 = vmatmul.mubr.f32.gmra.mxu0 %v352
        %v544 = vpop.f32.mrf.mxu0
        %v545 = vadd.f32 %v331, %v544
        %v546 = vpop.f32.mrf.mxu0
        %v547 = vadd.f32 %v331, %v546
        %548 = vdwg.mxu0
        %549 = vmatprep.subr.mxu0 0.0
        %550 = vmatpush1.msra.mxu0 0.0
        %551 = vmatprep.subr.mxu0 0.0
        %552 = vmatpush1.msra.mxu0 0.0
        %553 = vmatprep.subr.mxu0 0.0
        %554 = vmatpush1.msra.mxu0 0.0
        %555 = vmatprep.subr.mxu0 0.0
        %556 = vmatpush1.msra.mxu0 0.0
        %557 = vmatprep.subr.mxu0 0.0
        %558 = vmatpush1.msra.mxu0 0.0
        %559 = vmatprep.subr.mxu0 0.0
        %560 = vmatpush1.msra.mxu0 0.0
        %561 = vmatprep.subr.mxu0 0.0
        %562 = vmatpush1.msra.mxu0 0.0
        %563 = vmatprep.subr.mxu0 0.0
        %564 = vmatpush1.msra.mxu0 0.0
        %565 = vmatprep.subr.mxu0 0.0
        %566 = vmatpush1.msra.mxu0 0.0
        %567 = vmatprep.subr.mxu0 0.0
        %568 = vmatpush1.msra.mxu0 0.0
        %569 = vmatprep.subr.mxu0 0.0
        %570 = vmatpush1.msra.mxu0 0.0
        %571 = vmatprep.subr.mxu0 0.0
        %572 = vmatpush1.msra.mxu0 0.0
        %573 = vmatprep.subr.mxu0 0.0
        %574 = vmatpush1.msra.mxu0 0.0
        %575 = vmatprep.subr.mxu0 0.0
        %576 = vmatpush1.msra.mxu0 0.0
        %577 = vmatprep.subr.mxu0 0.0
        %578 = vmatpush1.msra.mxu0 0.0
        %579 = vmatprep.subr.mxu0 %v365
        %580 = vmatpush1.msra.mxu0 %v363
        %581 = vmatprep.subr.mxu0 0.0
        %582 = vmatpush2.msra.mxu0 0.0
        %583 = vmatprep.subr.mxu0 0.0
        %584 = vmatpush2.msra.mxu0 0.0
        %585 = vmatprep.subr.mxu0 0.0
        %586 = vmatpush2.msra.mxu0 0.0
        %587 = vmatprep.subr.mxu0 0.0
        %588 = vmatpush2.msra.mxu0 0.0
        %589 = vmatprep.subr.mxu0 0.0
        %590 = vmatpush2.msra.mxu0 0.0
        %591 = vmatprep.subr.mxu0 0.0
        %592 = vmatpush2.msra.mxu0 0.0
        %593 = vmatprep.subr.mxu0 0.0
        %594 = vmatpush2.msra.mxu0 0.0
        %595 = vmatprep.subr.mxu0 0.0
        %596 = vmatpush2.msra.mxu0 0.0
        %597 = vmatprep.subr.mxu0 0.0
        %598 = vmatpush2.msra.mxu0 0.0
        %599 = vmatprep.subr.mxu0 0.0
        %600 = vmatpush2.msra.mxu0 0.0
        %601 = vmatprep.subr.mxu0 0.0
        %602 = vmatpush2.msra.mxu0 0.0
        %603 = vmatprep.subr.mxu0 0.0
        %604 = vmatpush2.msra.mxu0 0.0
        %605 = vmatprep.subr.mxu0 0.0
        %606 = vmatpush2.msra.mxu0 0.0
        %607 = vmatprep.subr.mxu0 0.0
        %608 = vmatpush2.msra.mxu0 0.0
        %609 = vmatprep.subr.mxu0 0.0
        %610 = vmatpush2.msra.mxu0 0.0
        %611 = vmatprep.subr.mxu0 0.0
        %612 = vmatpush2.msra.mxu0 0.0
        %613 = vmatprep.mubr.f32.mxu0 0.0
        %614 = vmatmul.mubr.f32.gmra.mxu0 %v343
        %v615 = vpop.f32.mrf.mxu0
        %v616 = vadd.f32 %v316, %v615
        %v617 = vpop.f32.mrf.mxu0
        %v618 = vadd.f32 %v316, %v617
        %619 = vmatprep.mubr.f32.mxu0 0.0
        %620 = vmatmul.mubr.f32.gmra.mxu0 %v346
        %v621 = vpop.f32.mrf.mxu0
        %v622 = vadd.f32 %v321, %v621
        %v623 = vpop.f32.mrf.mxu0
        %v624 = vadd.f32 %v321, %v623
        %625 = vmatprep.mubr.f32.mxu0 0.0
        %626 = vmatmul.mubr.f32.gmra.mxu0 %v349
        %v627 = vpop.f32.mrf.mxu0
        %v628 = vadd.f32 %v326, %v627
        %v629 = vpop.f32.mrf.mxu0
        %v630 = vadd.f32 %v326, %v629
        %631 = vmatprep.mubr.f32.mxu0 0.0
        %632 = vmatmul.mubr.f32.gmra.mxu0 %v352
        %v633 = vpop.f32.mrf.mxu0
        %v634 = vadd.f32 %v331, %v633
        %v635 = vpop.f32.mrf.mxu0
        %v636 = vadd.f32 %v331, %v635
        %637 = vdwg.mxu0
        %638 = vmatprep.subr.mxu0 0.0
        %639 = vmatpush1.msra.mxu0 0.0
        %640 = vmatprep.subr.mxu0 0.0
        %641 = vmatpush1.msra.mxu0 0.0
        %642 = vmatprep.subr.mxu0 0.0
        %643 = vmatpush1.msra.mxu0 0.0
        %644 = vmatprep.subr.mxu0 0.0
        %645 = vmatpush1.msra.mxu0 0.0
        %646 = vmatprep.subr.mxu0 0.0
        %647 = vmatpush1.msra.mxu0 0.0
        %648 = vmatprep.subr.mxu0 0.0
        %649 = vmatpush1.msra.mxu0 0.0
        %650 = vmatprep.subr.mxu0 0.0
        %651 = vmatpush1.msra.mxu0 0.0
        %652 = vmatprep.subr.mxu0 0.0
        %653 = vmatpush1.msra.mxu0 0.0
        %654 = vmatprep.subr.mxu0 0.0
        %655 = vmatpush1.msra.mxu0 0.0
        %656 = vmatprep.subr.mxu0 0.0
        %657 = vmatpush1.msra.mxu0 0.0
        %658 = vmatprep.subr.mxu0 0.0
        %659 = vmatpush1.msra.mxu0 0.0
        %660 = vmatprep.subr.mxu0 0.0
        %661 = vmatpush1.msra.mxu0 0.0
        %662 = vmatprep.subr.mxu0 0.0
        %663 = vmatpush1.msra.mxu0 0.0
        %664 = vmatprep.subr.mxu0 0.0
        %665 = vmatpush1.msra.mxu0 0.0
        %666 = vmatprep.subr.mxu0 0.0
        %667 = vmatpush1.msra.mxu0 0.0
        %668 = vmatprep.subr.mxu0 %v369
        %669 = vmatpush1.msra.mxu0 %v367
        %670 = vmatprep.subr.mxu0 0.0
        %671 = vmatpush2.msra.mxu0 0.0
        %672 = vmatprep.subr.mxu0 0.0
        %673 = vmatpush2.msra.mxu0 0.0
        %674 = vmatprep.subr.mxu0 0.0
        %675 = vmatpush2.msra.mxu0 0.0
        %676 = vmatprep.subr.mxu0 0.0
        %677 = vmatpush2.msra.mxu0 0.0
        %678 = vmatprep.subr.mxu0 0.0
        %679 = vmatpush2.msra.mxu0 0.0
        %680 = vmatprep.subr.mxu0 0.0
        %681 = vmatpush2.msra.mxu0 0.0
        %682 = vmatprep.subr.mxu0 0.0
        %683 = vmatpush2.msra.mxu0 0.0
        %684 = vmatprep.subr.mxu0 0.0
        %685 = vmatpush2.msra.mxu0 0.0
        %686 = vmatprep.subr.mxu0 0.0
        %687 = vmatpush2.msra.mxu0 0.0
        %688 = vmatprep.subr.mxu0 0.0
        %689 = vmatpush2.msra.mxu0 0.0
        %690 = vmatprep.subr.mxu0 0.0
        %691 = vmatpush2.msra.mxu0 0.0
        %692 = vmatprep.subr.mxu0 0.0
        %693 = vmatpush2.msra.mxu0 0.0
        %694 = vmatprep.subr.mxu0 0.0
        %695 = vmatpush2.msra.mxu0 0.0
        %696 = vmatprep.subr.mxu0 0.0
        %697 = vmatpush2.msra.mxu0 0.0
        %698 = vmatprep.subr.mxu0 0.0
        %699 = vmatpush2.msra.mxu0 0.0
        %700 = vmatprep.subr.mxu0 0.0
        %701 = vmatpush2.msra.mxu0 0.0
        %702 = vmatprep.mubr.f32.mxu0 0.0
        %703 = vmatmul.mubr.f32.gmra.mxu0 %v343
        %v704 = vpop.f32.mrf.mxu0
        %v705 = vadd.f32 %v316, %v704
        %v706 = vpop.f32.mrf.mxu0
        %v707 = vadd.f32 %v316, %v706
        %708 = vmatprep.mubr.f32.mxu0 0.0
        %709 = vmatmul.mubr.f32.gmra.mxu0 %v346
        %v710 = vpop.f32.mrf.mxu0
        %v711 = vadd.f32 %v321, %v710
        %v712 = vpop.f32.mrf.mxu0
        %v713 = vadd.f32 %v321, %v712
        %714 = vmatprep.mubr.f32.mxu0 0.0
        %715 = vmatmul.mubr.f32.gmra.mxu0 %v349
        %v716 = vpop.f32.mrf.mxu0
        %v717 = vadd.f32 %v326, %v716
        %v718 = vpop.f32.mrf.mxu0
        %v719 = vadd.f32 %v326, %v718
        %720 = vmatprep.mubr.f32.mxu0 0.0
        %721 = vmatmul.mubr.f32.gmra.mxu0 %v352
        %v722 = vpop.f32.mrf.mxu0
        %v723 = vadd.f32 %v331, %v722
        %v724 = vpop.f32.mrf.mxu0
        %v725 = vadd.f32 %v331, %v724
        %726 = vdwg.mxu0
        %v727 = vmax.f32 %v438, 0.0
        %v728 = vmax.f32 %v440, 0.0
        %v729 = vmax.f32 %v527, 0.0
        %v730 = vmax.f32 %v529, 0.0
        %v731 = vmax.f32 %v616, 0.0
        %v732 = vmax.f32 %v618, 0.0
        %v733 = vmax.f32 %v705, 0.0
        %v734 = vmax.f32 %v707, 0.0
        %v735 = vmax.f32 %v444, 0.0
        %v736 = vmax.f32 %v446, 0.0
        %v737 = vmax.f32 %v533, 0.0
        %v738 = vmax.f32 %v535, 0.0
        %v739 = vmax.f32 %v622, 0.0
        %v740 = vmax.f32 %v624, 0.0
        %v741 = vmax.f32 %v711, 0.0
        %v742 = vmax.f32 %v713, 0.0
        %v743 = vmax.f32 %v450, 0.0
        %v744 = vmax.f32 %v452, 0.0
        %v745 = vmax.f32 %v539, 0.0
        %v746 = vmax.f32 %v541, 0.0
        %v747 = vmax.f32 %v628, 0.0
        %v748 = vmax.f32 %v630, 0.0
        %v749 = vmax.f32 %v717, 0.0
        %v750 = vmax.f32 %v719, 0.0
        %v751 = vmax.f32 %v456, 0.0
        %v752 = vmax.f32 %v458, 0.0
        %v753 = vmax.f32 %v545, 0.0
        %v754 = vmax.f32 %v547, 0.0
        %v755 = vmax.f32 %v634, 0.0
        %v756 = vmax.f32 %v636, 0.0
        %v757 = vmax.f32 %v723, 0.0
        %v758 = vmax.f32 %v725, 0.0
        %759 = vst [vmem:[%s277] sm:$0xff] %v727
        %760 = vst [vmem:[%s277 + $0x8] sm:$0xff] %v728
        %761 = vst [vmem:[%s277 + $0x10] sm:$0xff] %v729
        %762 = vst [vmem:[%s277 + $0x18] sm:$0xff] %v730
        %763 = vst [vmem:[%s277 + $0x20] sm:$0xff] %v731
        %764 = vst [vmem:[%s277 + $0x28] sm:$0xff] %v732
        %765 = vst [vmem:[%s277 + $0x30] sm:$0xff] %v733
        %766 = vst [vmem:[%s277 + $0x38] sm:$0xff] %v734
        %767 = vst [vmem:[%s277 + $0x40] sm:$0xff] %v735
        %768 = vst [vmem:[%s277 + $0x48] sm:$0xff] %v736
        %769 = vst [vmem:[%s277 + $0x50] sm:$0xff] %v737
        %770 = vst [vmem:[%s277 + $0x58] sm:$0xff] %v738
        %771 = vst [vmem:[%s277 + $0x60] sm:$0xff] %v739
        %772 = vst [vmem:[%s277 + $0x68] sm:$0xff] %v740
        %773 = vst [vmem:[%s277 + $0x70] sm:$0xff] %v741
        %774 = vst [vmem:[%s277 + $0x78] sm:$0xff] %v742
        %775 = vst [vmem:[%s277 + $0x80] sm:$0xff] %v743
        %776 = vst [vmem:[%s277 + $0x88] sm:$0xff] %v744
        %777 = vst [vmem:[%s277 + $0x90] sm:$0xff] %v745
        %778 = vst [vmem:[%s277 + $0x98] sm:$0xff] %v746
        %779 = vst [vmem:[%s277 + $0xa0] sm:$0xff] %v747
        %780 = vst [vmem:[%s277 + $0xa8] sm:$0xff] %v748
        %781 = vst [vmem:[%s277 + $0xb0] sm:$0xff] %v749
        %782 = vst [vmem:[%s277 + $0xb8] sm:$0xff] %v750
        %783 = vst [vmem:[%s277 + $0xc0] sm:$0xff] %v751
        %784 = vst [vmem:[%s277 + $0xc8] sm:$0xff] %v752
        %785 = vst [vmem:[%s277 + $0xd0] sm:$0xff] %v753
        %786 = vst [vmem:[%s277 + $0xd8] sm:$0xff] %v754
        %787 = vst [vmem:[%s277 + $0xe0] sm:$0xff] %v755
        %788 = vst [vmem:[%s277 + $0xe8] sm:$0xff] %v756
        %789 = vst [vmem:[%s277 + $0xf0] sm:$0xff] %v757
        %790 = vst [vmem:[%s277 + $0xf8] sm:$0xff] %v758
        %v791 = vld [vmem:[%s3] sm:$0xff]
        %v792 = vld [vmem:[%s3 + $0x8] sm:$0xff]
        %v793 = vld [vmem:[%s3 + $0x10] sm:$0xff]
        %v794 = vld [vmem:[%s3 + $0x18] sm:$0xff]
        %796 = vset.pattern.permute.xlu0 0
        %797 = vperm.xlu0 %796, %v791
        %v798 = vpop.permute.xlu0 %797
        %801 = vset.pattern.permute.xlu0 0
        %802 = vperm.xlu0 %801, %v792
        %v803 = vpop.permute.xlu0 %802
        %806 = vset.pattern.permute.xlu0 0
        %807 = vperm.xlu0 %806, %v793
        %v808 = vpop.permute.xlu0 %807
        %811 = vset.pattern.permute.xlu0 0
        %812 = vperm.xlu0 %811, %v794
        %v813 = vpop.permute.xlu0 %812
        %v815 = vmul.f32 %v727, %v798
        %v816 = vmul.f32 %v728, %v798
        %v817 = vmul.f32 %v729, %v798
        %v818 = vmul.f32 %v730, %v798
        %v819 = vmul.f32 %v731, %v798
        %v820 = vmul.f32 %v732, %v798
        %v821 = vmul.f32 %v733, %v798
        %v822 = vmul.f32 %v734, %v798
        %v823 = vmul.f32 %v735, %v803
        %v824 = vmul.f32 %v736, %v803
        %v825 = vmul.f32 %v737, %v803
        %v826 = vmul.f32 %v738, %v803
        %v827 = vmul.f32 %v739, %v803
        %v828 = vmul.f32 %v740, %v803
        %v829 = vmul.f32 %v741, %v803
        %v830 = vmul.f32 %v742, %v803
        %v831 = vmul.f32 %v743, %v808
        %v832 = vmul.f32 %v744, %v808
        %v833 = vmul.f32 %v745, %v808
        %v834 = vmul.f32 %v746, %v808
        %v835 = vmul.f32 %v747, %v808
        %v836 = vmul.f32 %v748, %v808
        %v837 = vmul.f32 %v749, %v808
        %v838 = vmul.f32 %v750, %v808
        %v839 = vmul.f32 %v751, %v813
        %v840 = vmul.f32 %v752, %v813
        %v841 = vmul.f32 %v753, %v813
        %v842 = vmul.f32 %v754, %v813
        %v843 = vmul.f32 %v755, %v813
        %v844 = vmul.f32 %v756, %v813
        %v845 = vmul.f32 %v757, %v813
        %v846 = vmul.f32 %v758, %v813
        %v847 = vadd.f32 %v815, %v823
        %v848 = vadd.f32 %v847, %v831
        %v849 = vadd.f32 %v848, %v839
        %v850 = vrot.slane %v849, 4
        %v851 = vadd.f32 %v849, %v850
        %v852 = vrot.slane %v851, 2
        %v853 = vadd.f32 %v851, %v852
        %v854 = vrot.slane %v853, 1
        %v855 = vadd.f32 %v853, %v854
        %v856 = vadd.f32 %v816, %v824
        %v857 = vadd.f32 %v856, %v832
        %v858 = vadd.f32 %v857, %v840
        %v859 = vrot.slane %v858, 4
        %v860 = vadd.f32 %v858, %v859
        %v861 = vrot.slane %v860, 2
        %v862 = vadd.f32 %v860, %v861
        %v863 = vrot.slane %v862, 1
        %v864 = vadd.f32 %v862, %v863
        %v865 = vadd.f32 %v817, %v825
        %v866 = vadd.f32 %v865, %v833
        %v867 = vadd.f32 %v866, %v841
        %v868 = vrot.slane %v867, 4
        %v869 = vadd.f32 %v867, %v868
        %v870 = vrot.slane %v869, 2
        %v871 = vadd.f32 %v869, %v870
        %v872 = vrot.slane %v871, 1
        %v873 = vadd.f32 %v871, %v872
        %v874 = vadd.f32 %v818, %v826
        %v875 = vadd.f32 %v874, %v834
        %v876 = vadd.f32 %v875, %v842
        %v877 = vrot.slane %v876, 4
        %v878 = vadd.f32 %v876, %v877
        %v879 = vrot.slane %v878, 2
        %v880 = vadd.f32 %v878, %v879
        %v881 = vrot.slane %v880, 1
        %v882 = vadd.f32 %v880, %v881
        %v883 = vadd.f32 %v819, %v827
        %v884 = vadd.f32 %v883, %v835
        %v885 = vadd.f32 %v884, %v843
        %v886 = vrot.slane %v885, 4
        %v887 = vadd.f32 %v885, %v886
        %v888 = vrot.slane %v887, 2
        %v889 = vadd.f32 %v887, %v888
        %v890 = vrot.slane %v889, 1
        %v891 = vadd.f32 %v889, %v890
        %v892 = vadd.f32 %v820, %v828
        %v893 = vadd.f32 %v892, %v836
        %v894 = vadd.f32 %v893, %v844
        %v895 = vrot.slane %v894, 4
        %v896 = vadd.f32 %v894, %v895
        %v897 = vrot.slane %v896, 2
        %v898 = vadd.f32 %v896, %v897
        %v899 = vrot.slane %v898, 1
        %v900 = vadd.f32 %v898, %v899
        %v901 = vadd.f32 %v821, %v829
        %v902 = vadd.f32 %v901, %v837
        %v903 = vadd.f32 %v902, %v845
        %v904 = vrot.slane %v903, 4
        %v905 = vadd.f32 %v903, %v904
        %v906 = vrot.slane %v905, 2
        %v907 = vadd.f32 %v905, %v906
        %v908 = vrot.slane %v907, 1
        %v909 = vadd.f32 %v907, %v908
        %v910 = vadd.f32 %v822, %v830
        %v911 = vadd.f32 %v910, %v838
        %v912 = vadd.f32 %v911, %v846
        %v913 = vrot.slane %v912, 4
        %v914 = vadd.f32 %v912, %v913
        %v915 = vrot.slane %v914, 2
        %v916 = vadd.f32 %v914, %v915
        %v917 = vrot.slane %v916, 1
        %v918 = vadd.f32 %v916, %v917
        %s919 = sld [smem:[#allocation2]]
        %v920 = vstv %s919
        %v921 = vadd.f32 %v855, %v920
        %v922 = vadd.f32 %v864, %v920
        %v923 = vadd.f32 %v873, %v920
        %v924 = vadd.f32 %v882, %v920
        %v925 = vadd.f32 %v891, %v920
        %v926 = vadd.f32 %v900, %v920
        %v927 = vadd.f32 %v909, %v920
        %v928 = vadd.f32 %v918, %v920
        %v929 = vxor.u32 %v921, 2147483648
        %v930 = vxor.u32 %v922, 2147483648
        %v931 = vxor.u32 %v923, 2147483648
        %v932 = vxor.u32 %v924, 2147483648
        %v933 = vxor.u32 %v925, 2147483648
        %v934 = vxor.u32 %v926, 2147483648
        %v935 = vxor.u32 %v927, 2147483648
        %v936 = vxor.u32 %v928, 2147483648
        %v937 = vmul.f32 %v929, 1.442695
        %v938 = vpow.pop %v937
        %v939 = vmul.f32 %v930, 1.442695
        %v940 = vpow.pop %v939
        %v941 = vmul.f32 %v931, 1.442695
        %v942 = vpow.pop %v941
        %v943 = vmul.f32 %v932, 1.442695
        %v944 = vpow.pop %v943
        %v945 = vmul.f32 %v933, 1.442695
        %v946 = vpow.pop %v945
        %v947 = vmul.f32 %v934, 1.442695
        %v948 = vpow.pop %v947
        %v949 = vmul.f32 %v935, 1.442695
        %v950 = vpow.pop %v949
        %v951 = vmul.f32 %v936, 1.442695
        %v952 = vpow.pop %v951
        %v953 = vadd.f32 %v938, 1.0
        %v954 = vadd.f32 %v940, 1.0
        %v955 = vadd.f32 %v942, 1.0
        %v956 = vadd.f32 %v944, 1.0
        %v957 = vadd.f32 %v946, 1.0
        %v958 = vadd.f32 %v948, 1.0
        %v959 = vadd.f32 %v950, 1.0
        %v960 = vadd.f32 %v952, 1.0
        %v961 = vrcp.pop %v953
        %v962 = vmul.f32 1.0, %v961
        %v963 = vrcp.pop %v954
        %v964 = vmul.f32 1.0, %v963
        %v965 = vrcp.pop %v955
        %v966 = vmul.f32 1.0, %v965
        %v967 = vrcp.pop %v956
        %v968 = vmul.f32 1.0, %v967
        %v969 = vrcp.pop %v957
        %v970 = vmul.f32 1.0, %v969
        %v971 = vrcp.pop %v958
        %v972 = vmul.f32 1.0, %v971
        %v973 = vrcp.pop %v959
        %v974 = vmul.f32 1.0, %v973
        %v975 = vrcp.pop %v960
        %v976 = vmul.f32 1.0, %v975
        %v985 = vcombine.low %v962, %v964
        %v986 = vcombine.low %v966, %v968
        %v987 = vcombine.low %v970, %v972
        %v988 = vcombine.low %v974, %v976
        %v990 = vunpack.c.l.s4 1966171168
        %v991 = vunpack.c.0.s8 %v990
        %v992 = vlaneseq
        %v993 = vshrl.u32 %v992, 7
        %v994 = vsub.s32 %v991, %v993
        %v995 = vrot.slane %v985, %v994
        %v997 = vunpack.c.l.s4 1966171168
        %v998 = vunpack.c.0.s8 %v997
        %v999 = vlaneseq
        %v1000 = vshrl.u32 %v999, 7
        %v1001 = vsub.s32 %v998, %v1000
        %v1002 = vrot.slane %v986, %v1001
        %v1004 = vunpack.c.l.s4 1966171168
        %v1005 = vunpack.c.0.s8 %v1004
        %v1006 = vlaneseq
        %v1007 = vshrl.u32 %v1006, 7
        %v1008 = vsub.s32 %v1005, %v1007
        %v1009 = vrot.slane %v987, %v1008
        %v1011 = vunpack.c.l.s4 1966171168
        %v1012 = vunpack.c.0.s8 %v1011
        %v1013 = vlaneseq
        %v1014 = vshrl.u32 %v1013, 7
        %v1015 = vsub.s32 %v1012, %v1014
        %v1016 = vrot.slane %v988, %v1015
        %v1017 = vcombine.low %v995, %v1002
        %v1018 = vcombine.low %v1009, %v1016
        %v1020 = vunpack.c.l.s4 1966171168
        %v1021 = vunpack.c.0.s8 %v1020
        %v1022 = vlaneseq
        %v1023 = vshrl.u32 %v1022, 7
        %v1024 = vsub.s32 %v1021, %v1023
        %v1025 = vrot.slane %v1017, %v1024
        %v1027 = vunpack.c.l.s4 1966171168
        %v1028 = vunpack.c.0.s8 %v1027
        %v1029 = vlaneseq
        %v1030 = vshrl.u32 %v1029, 7
        %v1031 = vsub.s32 %v1028, %v1030
        %v1032 = vrot.slane %v1018, %v1031
        %v1033 = vcombine.low %v1025, %v1032
        %1035 = vst [vmem:[%s291] sm:$0xff] %v1033
        %v1036 = vld [vmem:[%s277] sm:$0xff]
        %v1037 = vld [vmem:[%s277 + $0x8] sm:$0xff]
        %v1038 = vld [vmem:[%s277 + $0x10] sm:$0xff]
        %v1039 = vld [vmem:[%s277 + $0x18] sm:$0xff]
        %v1040 = vld [vmem:[%s277 + $0x20] sm:$0xff]
        %v1041 = vld [vmem:[%s277 + $0x28] sm:$0xff]
        %v1042 = vld [vmem:[%s277 + $0x30] sm:$0xff]
        %v1043 = vld [vmem:[%s277 + $0x38] sm:$0xff]
        %v1044 = vld [vmem:[%s277 + $0x40] sm:$0xff]
        %v1045 = vld [vmem:[%s277 + $0x48] sm:$0xff]
        %v1046 = vld [vmem:[%s277 + $0x50] sm:$0xff]
        %v1047 = vld [vmem:[%s277 + $0x58] sm:$0xff]
        %v1048 = vld [vmem:[%s277 + $0x60] sm:$0xff]
        %v1049 = vld [vmem:[%s277 + $0x68] sm:$0xff]
        %v1050 = vld [vmem:[%s277 + $0x70] sm:$0xff]
        %v1051 = vld [vmem:[%s277 + $0x78] sm:$0xff]
        %v1052 = vld [vmem:[%s277 + $0x80] sm:$0xff]
        %v1053 = vld [vmem:[%s277 + $0x88] sm:$0xff]
        %v1054 = vld [vmem:[%s277 + $0x90] sm:$0xff]
        %v1055 = vld [vmem:[%s277 + $0x98] sm:$0xff]
        %v1056 = vld [vmem:[%s277 + $0xa0] sm:$0xff]
        %v1057 = vld [vmem:[%s277 + $0xa8] sm:$0xff]
        %v1058 = vld [vmem:[%s277 + $0xb0] sm:$0xff]
        %v1059 = vld [vmem:[%s277 + $0xb8] sm:$0xff]
        %v1060 = vld [vmem:[%s277 + $0xc0] sm:$0xff]
        %v1061 = vld [vmem:[%s277 + $0xc8] sm:$0xff]
        %v1062 = vld [vmem:[%s277 + $0xd0] sm:$0xff]
        %v1063 = vld [vmem:[%s277 + $0xd8] sm:$0xff]
        %v1064 = vld [vmem:[%s277 + $0xe0] sm:$0xff]
        %v1065 = vld [vmem:[%s277 + $0xe8] sm:$0xff]
        %v1066 = vld [vmem:[%s277 + $0xf0] sm:$0xff]
        %v1067 = vld [vmem:[%s277 + $0xf8] sm:$0xff]
        %v1068 = vmul.f32 %v1036, %v962
        %v1069 = vmul.f32 %v1037, %v964
        %v1070 = vmul.f32 %v1038, %v966
        %v1071 = vmul.f32 %v1039, %v968
        %v1072 = vmul.f32 %v1040, %v970
        %v1073 = vmul.f32 %v1041, %v972
        %v1074 = vmul.f32 %v1042, %v974
        %v1075 = vmul.f32 %v1043, %v976
        %v1076 = vmul.f32 %v1044, %v962
        %v1077 = vmul.f32 %v1045, %v964
        %v1078 = vmul.f32 %v1046, %v966
        %v1079 = vmul.f32 %v1047, %v968
        %v1080 = vmul.f32 %v1048, %v970
        %v1081 = vmul.f32 %v1049, %v972
        %v1082 = vmul.f32 %v1050, %v974
        %v1083 = vmul.f32 %v1051, %v976
        %v1084 = vmul.f32 %v1052, %v962
        %v1085 = vmul.f32 %v1053, %v964
        %v1086 = vmul.f32 %v1054, %v966
        %v1087 = vmul.f32 %v1055, %v968
        %v1088 = vmul.f32 %v1056, %v970
        %v1089 = vmul.f32 %v1057, %v972
        %v1090 = vmul.f32 %v1058, %v974
        %v1091 = vmul.f32 %v1059, %v976
        %v1092 = vmul.f32 %v1060, %v962
        %v1093 = vmul.f32 %v1061, %v964
        %v1094 = vmul.f32 %v1062, %v966
        %v1095 = vmul.f32 %v1063, %v968
        %v1096 = vmul.f32 %v1064, %v970
        %v1097 = vmul.f32 %v1065, %v972
        %v1098 = vmul.f32 %v1066, %v974
        %v1099 = vmul.f32 %v1067, %v976
        %1100 = vst [vmem:[%s284] sm:$0xff] %v1068
        %1101 = vst [vmem:[%s284 + $0x8] sm:$0xff] %v1069
        %1102 = vst [vmem:[%s284 + $0x10] sm:$0xff] %v1070
        %1103 = vst [vmem:[%s284 + $0x18] sm:$0xff] %v1071
        %1104 = vst [vmem:[%s284 + $0x20] sm:$0xff] %v1072
        %1105 = vst [vmem:[%s284 + $0x28] sm:$0xff] %v1073
        %1106 = vst [vmem:[%s284 + $0x30] sm:$0xff] %v1074
        %1107 = vst [vmem:[%s284 + $0x38] sm:$0xff] %v1075
        %1108 = vst [vmem:[%s284 + $0x40] sm:$0xff] %v1076
        %1109 = vst [vmem:[%s284 + $0x48] sm:$0xff] %v1077
        %1110 = vst [vmem:[%s284 + $0x50] sm:$0xff] %v1078
        %1111 = vst [vmem:[%s284 + $0x58] sm:$0xff] %v1079
        %1112 = vst [vmem:[%s284 + $0x60] sm:$0xff] %v1080
        %1113 = vst [vmem:[%s284 + $0x68] sm:$0xff] %v1081
        %1114 = vst [vmem:[%s284 + $0x70] sm:$0xff] %v1082
        %1115 = vst [vmem:[%s284 + $0x78] sm:$0xff] %v1083
        %1116 = vst [vmem:[%s284 + $0x80] sm:$0xff] %v1084
        %1117 = vst [vmem:[%s284 + $0x88] sm:$0xff] %v1085
        %1118 = vst [vmem:[%s284 + $0x90] sm:$0xff] %v1086
        %1119 = vst [vmem:[%s284 + $0x98] sm:$0xff] %v1087
        %1120 = vst [vmem:[%s284 + $0xa0] sm:$0xff] %v1088
        %1121 = vst [vmem:[%s284 + $0xa8] sm:$0xff] %v1089
        %1122 = vst [vmem:[%s284 + $0xb0] sm:$0xff] %v1090
        %1123 = vst [vmem:[%s284 + $0xb8] sm:$0xff] %v1091
        %1124 = vst [vmem:[%s284 + $0xc0] sm:$0xff] %v1092
        %1125 = vst [vmem:[%s284 + $0xc8] sm:$0xff] %v1093
        %1126 = vst [vmem:[%s284 + $0xd0] sm:$0xff] %v1094
        %1127 = vst [vmem:[%s284 + $0xd8] sm:$0xff] %v1095
        %1128 = vst [vmem:[%s284 + $0xe0] sm:$0xff] %v1096
        %1129 = vst [vmem:[%s284 + $0xe8] sm:$0xff] %v1097
        %1130 = vst [vmem:[%s284 + $0xf0] sm:$0xff] %v1098
        %1131 = vst [vmem:[%s284 + $0xf8] sm:$0xff] %v1099
        %s1132 = sand.u32 %s144, 1
        %s1133 = scalar_lea.sflag [#allocation4], %s1132
        %s1134 = sand.u32 %s144, 1
        %s1135 = smul.addr %s1134, 256
        %s1136 = scalar_lea.vmem [#allocation3], %s1135
        %s1137 = sand.u32 %s26, 1
        %s1138 = scalar_lea.sflag [#allocation6], %s1137
        %s1139 = sand.u32 %s170, 1
        %s1140 = smul.addr %s1139, 256
        %s1141 = scalar_lea.vmem [#allocation5], %s1140
        %s1142 = sand.u32 %s26, 1
        %s1143 = scalar_lea.sflag [#allocation6], %s1142
        %s1144 = sand.u32 %s196, 1
        %s1145 = smul.addr %s1144, 8
        %s1146 = scalar_lea.vmem [#allocation7], %s1145
        // Predicated region
        $region41: #{tpu_custom_call.1} parent=39 // pred_check
          %p1147 = pneg %p154
        $region42: #{tpu_custom_call.1} parent=39 // pred_check_branch
          %1149 = sbr.rel (%p1147) target = $region44
        $region43: #{tpu_custom_call.1} parent=39 // pred_region
          %s1150 = smul.u32 8, %s26
          %s1152 = ssub.s32 4096, 4096
          %1153 = vsyncadd %s1133, %s1152
          %s1154 = smul.addr %s1150, 128
          %s1155 = scalar_lea.hbm %s5, %s1154
          %s1156 = sshll.u32 %s1136, 4
          %s1157 = int_to_ptr.vmem [resolvable:$true] %s1156
          %1162 = dma.vmem_to_hbm [thread:$0]  %s1157, 4096, %s1155, %s1133, 1024, 2048, 64
        $region44: #{tpu_custom_call.1} parent=39 // pred_fallthru
          _
        // Predicated region
        $region45: #{tpu_custom_call.1} parent=39 // pred_check
          %p1163 = pneg %p180
        $region46: #{tpu_custom_call.1} parent=39 // pred_check_branch
          %1165 = sbr.rel (%p1163) target = $region48
        $region47: #{tpu_custom_call.1} parent=39 // pred_region
          %s1166 = smul.u32 8, %s26
          %s1168 = ssub.s32 4096, 4096
          %1169 = vsyncadd %s1138, %s1168
          %s1170 = smul.addr %s1166, 128
          %s1171 = scalar_lea.hbm %s6, %s1170
          %s1172 = sshll.u32 %s1141, 4
          %s1173 = int_to_ptr.vmem [resolvable:$true] %s1172
          %1178 = dma.vmem_to_hbm [thread:$0]  %s1173, 4096, %s1171, %s1138, 1024, 2048, 64
        $region48: #{tpu_custom_call.1} parent=39 // pred_fallthru
          _
        // Predicated region
        $region49: #{tpu_custom_call.1} parent=39 // pred_check
          %p1179 = pneg %p206
        $region50: #{tpu_custom_call.1} parent=39 // pred_check_branch
          %1181 = sbr.rel (%p1179) target = $region52
        $region51: #{tpu_custom_call.1} parent=39 // pred_region
          %s1182 = smul.u32 8, %s26
          %s1184 = ssub.s32 128, 128
          %1185 = vsyncadd %s1143, %s1184
          %s1186 = smul.addr %s1182, 16
          %s1187 = scalar_lea.hbm %s7, %s1186
          %s1189 = sshll.u32 %s1146, 4
          %s1190 = int_to_ptr.vmem [resolvable:$true] %s1189
          %1192 = dma.vmem_to_hbm [thread:$0]  %s1190, 128, %s1187, %s1143
        $region52: #{tpu_custom_call.1} parent=39 // pred_fallthru
          _
      $region40: #{tpu_custom_call.1} parent=5 // pred_fallthru
        _
      %p1193 = scmp.le.s32.totalorder 2, %s21
      // Predicated region
      $region53: #{tpu_custom_call.1} parent=5 // pred_check
        %p1194 = pneg %p1193
      $region54: #{tpu_custom_call.1} parent=5 // pred_check_branch
        %1196 = sbr.rel (%p1194) target = $region56
      $region55: #{tpu_custom_call.1} parent=5 // pred_region
        %s1197 = ssub.s32 %s21, 2
        // Predicated region
        $region57: #{tpu_custom_call.1} parent=55 // pred_check
          %p1198 = pneg %p160
        $region58: #{tpu_custom_call.1} parent=55 // pred_check_branch
          %1200 = sbr.rel (%p1198) target = $region60
        $region59: #{tpu_custom_call.1} parent=55 // pred_region
          %s1201 = sand.u32 %s145, 1
          %s1202 = scalar_lea.sflag [#allocation4], %s1201
          %s1203 = sand.u32 %s145, 1
          %s1204 = smul.addr %s1203, 256
          %s1205 = scalar_lea.vmem [#allocation3], %s1204
          %1206 = dma.done %s1202, 4096
        $region60: #{tpu_custom_call.1} parent=55 // pred_fallthru
          _
        // Predicated region
        $region61: #{tpu_custom_call.1} parent=55 // pred_check
          %p1207 = pneg %p186
        $region62: #{tpu_custom_call.1} parent=55 // pred_check_branch
          %1209 = sbr.rel (%p1207) target = $region64
        $region63: #{tpu_custom_call.1} parent=55 // pred_region
          %s1210 = sand.u32 %s27, 1
          %s1211 = scalar_lea.sflag [#allocation6], %s1210
          %s1212 = sand.u32 %s171, 1
          %s1213 = smul.addr %s1212, 256
          %s1214 = scalar_lea.vmem [#allocation5], %s1213
          %1215 = dma.done %s1211, 4096
        $region64: #{tpu_custom_call.1} parent=55 // pred_fallthru
          _
        // Predicated region
        $region65: #{tpu_custom_call.1} parent=55 // pred_check
          %p1216 = pneg %p212
        $region66: #{tpu_custom_call.1} parent=55 // pred_check_branch
          %1218 = sbr.rel (%p1216) target = $region68
        $region67: #{tpu_custom_call.1} parent=55 // pred_region
          %s1219 = sand.u32 %s27, 1
          %s1220 = scalar_lea.sflag [#allocation6], %s1219
          %s1221 = sand.u32 %s197, 1
          %s1222 = smul.addr %s1221, 8
          %s1223 = scalar_lea.vmem [#allocation7], %s1222
          %1224 = dma.done %s1220, 128
        $region68: #{tpu_custom_call.1} parent=55 // pred_fallthru
          _
      $region56: #{tpu_custom_call.1} parent=5 // pred_fallthru
        _
    $region6: #{tpu_custom_call.1} parent=1 // loop_footer
      %s25 = sadd.s32 1, %s21
    $region7: #{tpu_custom_call.1} parent=1 // loop_footer_branch
      %20 = sbr.rel target = $region3
    $region8: #{tpu_custom_call.1} parent=1 // loop_exit
      _
    %1225 = vsyncpa [#allocation4], 1
    %s1226 = scalar_lea.sflag [#allocation4], 1
    %1227 = vsyncpa %s1226, 1
    %1228 = vsyncpa [#allocation6], 1
    %s1229 = scalar_lea.sflag [#allocation6], 1
    %1230 = vsyncpa %s1229, 1

</llo_original>
